<compile_context>
chip_gen: v5e
topology: v5e:2x2
jax: 0.10.0
libtpu: 0.0.40
codegen_flags: <defaults>
</compile_context>

<pallas_src>
import functools

import jax
import jax.numpy as jnp
from jax.experimental import pallas as pl
from jax.experimental.pallas import tpu as pltpu


def _stacked_lstm_kernel(x0_ref, w_ref, b_ref, h0_ref, c0_ref,
                         h1_ref, c1_ref, xh_ref, *, hidden_size, x_width):
    """One grid step == one LSTM layer.  xh_ref (VMEM scratch) carries the
    layer input across grid iterations: columns [0, x_width) hold x, columns
    [x_width, x_width+H) hold this layer's previous hidden state h_0[l]."""
    layer = pl.program_id(0)
    H = hidden_size

    # Layer 0 reads the (padded) external input; later layers reuse the h_new
    # written into xh_ref at the end of the previous grid step.  Any stale
    # columns in [H, x_width) are harmless: those weight rows are zero for
    # layers > 0.
    @pl.when(layer == 0)
    def _():
        xh_ref[:, pl.ds(0, x_width)] = x0_ref[...].astype(jnp.float32)

    # This layer's previous hidden state goes in the trailing H columns.
    xh_ref[:, pl.ds(x_width, H)] = h0_ref[0].astype(jnp.float32)

    # Single fused matmul on the MXU: (B, x_width+H) @ (x_width+H, 4H).
    gates = (jnp.dot(xh_ref[...].astype(w_ref.dtype), w_ref[0],
                     preferred_element_type=jnp.float32)
             + b_ref[0])

    # Gate math in f32 (sigmoid/tanh go to the EUP slot).
    i_g = jax.nn.sigmoid(gates[:, 0 * H:1 * H])
    f_g = jax.nn.sigmoid(gates[:, 1 * H:2 * H])
    g_g = jnp.tanh(gates[:, 2 * H:3 * H])
    o_g = jax.nn.sigmoid(gates[:, 3 * H:4 * H])

    c_new = f_g * c0_ref[0].astype(jnp.float32) + i_g * g_g
    h_new = o_g * jnp.tanh(c_new)

    h1_ref[0] = h_new.astype(h1_ref.dtype)
    c1_ref[0] = c_new.astype(c1_ref.dtype)

    # Carry h_new as the next layer's input (dropout is identity in eval mode).
    @pl.when(layer + 1 < pl.num_programs(0))
    def _():
        xh_ref[:, pl.ds(0, H)] = h_new


def stacked_lstm_forward(input_feed, hidden, params):
    """Mirrors StackedLSTM.forward: returns (output, (h_1, c_1)).

    input_feed: (B, input_size); hidden: ((L, B, H), (L, B, H)).
    params: {"w": (L, x_width + H, 4H), "b": (L, 1, 4H)} pre-packed weights.
    """
    h_0, c_0 = hidden
    w, b = params["w"], params["b"]
    L, B, H = h_0.shape
    K = w.shape[1]
    x_width = K - H

    in_dim = input_feed.shape[-1]
    if in_dim < x_width:  # zero-pad the external input up to the packed width
        input_feed = jnp.pad(input_feed, ((0, 0), (0, x_width - in_dim)))

    kernel = functools.partial(_stacked_lstm_kernel,
                               hidden_size=H, x_width=x_width)

    h_1, c_1 = pl.pallas_call(
        kernel,
        out_shape=(jax.ShapeDtypeStruct((L, B, H), h_0.dtype),
                   jax.ShapeDtypeStruct((L, B, H), c_0.dtype)),
        grid_spec=pltpu.PrefetchScalarGridSpec(
            num_scalar_prefetch=0,
            grid=(L,),
            in_specs=[
                pl.BlockSpec((B, x_width), lambda l: (0, 0)),     # x0 (resident)
                pl.BlockSpec((1, K, 4 * H), lambda l: (l, 0, 0)),  # packed W
                pl.BlockSpec((1, 1, 4 * H), lambda l: (l, 0, 0)),  # bias
                pl.BlockSpec((1, B, H), lambda l: (l, 0, 0)),      # h_0[l]
                pl.BlockSpec((1, B, H), lambda l: (l, 0, 0)),      # c_0[l]
            ],
            out_specs=[
                pl.BlockSpec((1, B, H), lambda l: (l, 0, 0)),      # h_1[l]
                pl.BlockSpec((1, B, H), lambda l: (l, 0, 0)),      # c_1[l]
            ],
            scratch_shapes=[pltpu.VMEM((B, K), jnp.float32)],      # xh carry
        ),
        compiler_params=pltpu.CompilerParams(
            dimension_semantics=("arbitrary",)),  # layers are sequential
        # TODO(synk): if H grows so per-layer weights approach the scoped VMEM
        # limit (esp. v7x, 64 MiB), tile the 4H axis via BlockSpec and set
        # vmem_limit_bytes explicitly.
    )(input_feed, w, b, h_0, c_0)

    # No dropout after the last layer, so output == h_1[-1].
    return h_1[-1], (h_1, c_1)


def init_stacked_lstm_params(key, num_layers, input_size, hidden_size,
                             param_dtype=jnp.float32):
    """Pack per-layer nn.LSTMCell weights into a fused (L, x_width+H, 4H) stack.

    Row layout of each layer's packed matrix:
      rows [0, in_dim)          : W_ih^T            (in_dim = input_size for
                                                     layer 0, else hidden_size)
      rows [in_dim, x_width)    : zeros (padding)
      rows [x_width, x_width+H) : W_hh^T
    Bias is the combined (b_ih + b_hh), kept in f32.
    """
    H = hidden_size
    x_width = max(input_size, H)
    K = x_width + H
    ws, bs = [], []
    in_sz = input_size
    for _ in range(num_layers):
        key, k1, k2, k3, k4 = jax.random.split(key, 5)
        bound = 1.0 / float(H) ** 0.5
        w_ih = jax.random.uniform(k1, (4 * H, in_sz), jnp.float32,
                                  minval=-bound, maxval=bound)
        w_hh = jax.random.uniform(k2, (4 * H, H), jnp.float32,
                                  minval=-bound, maxval=bound)
        b_ih = jax.random.uniform(k3, (4 * H,), jnp.float32,
                                  minval=-bound, maxval=bound)
        b_hh = jax.random.uniform(k4, (4 * H,), jnp.float32,
                                  minval=-bound, maxval=bound)
        w = jnp.zeros((K, 4 * H), jnp.float32)
        w = w.at[:in_sz, :].set(w_ih.T)
        w = w.at[x_width:, :].set(w_hh.T)
        ws.append(w)
        bs.append((b_ih + b_hh).reshape(1, -1))
        in_sz = H
    return {"w": jnp.stack(ws).astype(param_dtype),
            "b": jnp.stack(bs).astype(jnp.float32)}


def _reference_forward(input_feed, hidden, params):
    """Pure-JAX (f32) reference mirroring the PyTorch two-matmul formulation."""
    h_0, c_0 = hidden
    w = params["w"].astype(jnp.float32)
    b = params["b"]
    L, _, H = h_0.shape
    x_width = w.shape[1] - H
    x = input_feed
    h_1, c_1 = [], []
    for l in range(L):
        w_ih_t = w[l, :x.shape[-1], :]
        w_hh_t = w[l, x_width:, :]
        gates = x @ w_ih_t + h_0[l] @ w_hh_t + b[l]
        i_g = jax.nn.sigmoid(gates[:, 0 * H:1 * H])
        f_g = jax.nn.sigmoid(gates[:, 1 * H:2 * H])
        g_g = jnp.tanh(gates[:, 2 * H:3 * H])
        o_g = jax.nn.sigmoid(gates[:, 3 * H:4 * H])
        c_l = f_g * c_0[l] + i_g * g_g
        h_l = o_g * jnp.tanh(c_l)
        x = h_l  # dropout is identity in eval mode
        h_1.append(h_l)
        c_1.append(c_l)
    return x, (jnp.stack(h_1), jnp.stack(c_1))


if __name__ == "__main__":
    num_layers = 3
    input_size = 128   # lane-dense (multiple of 128)
    hidden_size = 128  # lane-dense (multiple of 128)
    batch = 8

    key = jax.random.PRNGKey(0)
    key, kx, kh, kc, kp = jax.random.split(key, 5)
    x = jax.random.normal(kx, (batch, input_size), jnp.float32)
    h0 = jax.random.normal(kh, (num_layers, batch, hidden_size), jnp.float32)
    c0 = jax.random.normal(kc, (num_layers, batch, hidden_size), jnp.float32)

    # --- f32 weights: tight tolerance vs. pure-JAX reference ---
    params_f32 = init_stacked_lstm_params(kp, num_layers, input_size,
                                          hidden_size, param_dtype=jnp.float32)
    out, (h1, c1) = stacked_lstm_forward(x, (h0, c0), params_f32)
    jax.block_until_ready((out, h1, c1))
    ref_out, (ref_h1, ref_c1) = _reference_forward(x, (h0, c0), params_f32)
    assert jnp.allclose(out, ref_out, atol=1e-5)
    assert jnp.allclose(h1, ref_h1, atol=1e-5)
    assert jnp.allclose(c1, ref_c1, atol=1e-5)

    # --- bf16 weights on the MXU (f32 accumulate + f32 gate math): looser tol ---
    params_bf16 = init_stacked_lstm_params(kp, num_layers, input_size,
                                           hidden_size, param_dtype=jnp.bfloat16)
    out_b, (h1_b, c1_b) = stacked_lstm_forward(x, (h0, c0), params_bf16)
    jax.block_until_ready((out_b, h1_b, c1_b))
    ref_out_b, (ref_h1_b, ref_c1_b) = _reference_forward(x, (h0, c0), params_bf16)
    assert jnp.allclose(out_b, ref_out_b, atol=2e-2, rtol=2e-2)
    assert jnp.allclose(h1_b, ref_h1_b, atol=2e-2, rtol=2e-2)
    assert jnp.allclose(c1_b, ref_c1_b, atol=2e-2, rtol=2e-2)

    print("KERNEL_OK")
</pallas_src>

<mosaic_0001>
module attributes {stable_mosaic.version = 11 : i64} {
  func.func @_stacked_lstm_kernel(%arg0: i32, %arg1: memref<8x128xf32, #tpu.memory_space<vmem>>, %arg2: memref<1x256x512xf32, #tpu.memory_space<vmem>>, %arg3: memref<1x1x512xf32, #tpu.memory_space<vmem>>, %arg4: memref<1x8x128xf32, #tpu.memory_space<vmem>>, %arg5: memref<1x8x128xf32, #tpu.memory_space<vmem>>, %arg6: memref<1x8x128xf32, #tpu.memory_space<vmem>>, %arg7: memref<1x8x128xf32, #tpu.memory_space<vmem>>, %arg8: memref<8x256xf32, #tpu.memory_space<vmem>>) attributes {dimension_semantics = [#tpu.dimension_semantics<arbitrary>], iteration_bounds = array<i64: 3>, scalar_prefetch = 0 : i64, scratch_operands = 1 : i64, tpu.core_type = #tpu.core_type<tc>, window_params = [{pipeline_mode = #tpu.pipeline_mode<synchronous>, transform_indices = @transform_0, window_bounds = array<i64: 8, 128>}, {transform_indices = @transform_1, window_bounds = array<i64: 1, 256, 512>}, {transform_indices = @transform_2, window_bounds = array<i64: 1, 1, 512>}, {transform_indices = @transform_3, window_bounds = array<i64: 1, 8, 128>}, {transform_indices = @transform_4, window_bounds = array<i64: 1, 8, 128>}, {transform_indices = @transform_5, window_bounds = array<i64: 1, 8, 128>}, {transform_indices = @transform_6, window_bounds = array<i64: 1, 8, 128>}]} {
    %c0_i32 = arith.constant 0 : i32
    %0 = arith.cmpi eq, %arg0, %c0_i32 : i32
    %1 = arith.extui %0 : i1 to i32
    %c0_i32_0 = arith.constant 0 : i32
    %2 = arith.cmpi ne, %1, %c0_i32_0 : i32
    scf.if %2 {
      %c0_25 = arith.constant 0 : index
      %c0_26 = arith.constant 0 : index
      %51 = vector.load %arg1[%c0_25, %c0_26] : memref<8x128xf32, #tpu.memory_space<vmem>>, vector<8x128xf32>
      %c0_27 = arith.constant 0 : index
      %c0_28 = arith.constant 0 : index
      %52 = vector.load %arg8[%c0_27, %c0_28] : memref<8x256xf32, #tpu.memory_space<vmem>>, vector<8x128xf32>
      tpu.vector_store %arg8[%c0_27, %c0_28], %51 {strides = array<i32>} : memref<8x256xf32, #tpu.memory_space<vmem>>, vector<8x128xf32>,
    } else {
    }
    %c0 = arith.constant 0 : index
    %c0_1 = arith.constant 0 : index
    %c0_2 = arith.constant 0 : index
    %3 = vector.load %arg4[%c0, %c0_1, %c0_2] : memref<1x8x128xf32, #tpu.memory_space<vmem>>, vector<1x8x128xf32>
    %4 = vector.shape_cast %3 : vector<1x8x128xf32> to vector<8x128xf32>
    %c0_3 = arith.constant 0 : index
    %c128 = arith.constant 128 : index
    %5 = vector.load %arg8[%c0_3, %c128] : memref<8x256xf32, #tpu.memory_space<vmem>>, vector<8x128xf32>
    tpu.vector_store %arg8[%c0_3, %c128], %4 {strides = array<i32>} : memref<8x256xf32, #tpu.memory_space<vmem>>, vector<8x128xf32>,
    %c0_4 = arith.constant 0 : index
    %c0_5 = arith.constant 0 : index
    %6 = vector.load %arg8[%c0_4, %c0_5] : memref<8x256xf32, #tpu.memory_space<vmem>>, vector<8x256xf32>
    %c0_6 = arith.constant 0 : index
    %c0_7 = arith.constant 0 : index
    %c0_8 = arith.constant 0 : index
    %7 = vector.load %arg2[%c0_6, %c0_7, %c0_8] : memref<1x256x512xf32, #tpu.memory_space<vmem>>, vector<1x256x512xf32>
    %8 = vector.shape_cast %7 : vector<1x256x512xf32> to vector<256x512xf32>
    %cst = arith.constant dense<0.000000e+00> : vector<8x512xf32>
    %9 = tpu.matmul %6, %8, %cst {dimension_numbers = #tpu.dot_dimension_numbers<[1], [0], [0], [1], [0, 0, 1, 1], [], []>} : vector<8x256xf32>, vector<256x512xf32>, vector<8x512xf32> -> vector<8x512xf32>
    %c0_9 = arith.constant 0 : index
    %c0_10 = arith.constant 0 : index
    %c0_11 = arith.constant 0 : index
    %10 = vector.load %arg3[%c0_9, %c0_10, %c0_11] : memref<1x1x512xf32, #tpu.memory_space<vmem>>, vector<1x1x512xf32>
    %11 = vector.shape_cast %10 : vector<1x1x512xf32> to vector<1x512xf32>
    %12 = vector.broadcast %11 : vector<1x512xf32> to vector<8x512xf32>
    %13 = arith.addf %9, %12 : vector<8x512xf32>
    %14 = vector.extract_strided_slice %13 {offsets = [0, 0], sizes = [8, 128], strides = [1, 1]} : vector<8x512xf32> to vector<8x128xf32>
    %15 = arith.negf %14 : vector<8x128xf32>
    %16 = math.exp %15 : vector<8x128xf32>
    %cst_12 = arith.constant 1.000000e+00 : f32
    %17 = vector.broadcast %cst_12 : f32 to vector<8x128xf32>
    %18 = arith.addf %17, %16 : vector<8x128xf32>
    %19 = arith.divf %17, %18 : vector<8x128xf32>
    %20 = vector.extract_strided_slice %13 {offsets = [0, 128], sizes = [8, 128], strides = [1, 1]} : vector<8x512xf32> to vector<8x128xf32>
    %21 = arith.negf %20 : vector<8x128xf32>
    %22 = math.exp %21 : vector<8x128xf32>
    %cst_13 = arith.constant 1.000000e+00 : f32
    %23 = vector.broadcast %cst_13 : f32 to vector<8x128xf32>
    %24 = arith.addf %23, %22 : vector<8x128xf32>
    %25 = arith.divf %23, %24 : vector<8x128xf32>
    %26 = vector.extract_strided_slice %13 {offsets = [0, 256], sizes = [8, 128], strides = [1, 1]} : vector<8x512xf32> to vector<8x128xf32>
    %27 = math.tanh %26 : vector<8x128xf32>
    %28 = vector.extract_strided_slice %13 {offsets = [0, 384], sizes = [8, 128], strides = [1, 1]} : vector<8x512xf32> to vector<8x128xf32>
    %29 = arith.negf %28 : vector<8x128xf32>
    %30 = math.exp %29 : vector<8x128xf32>
    %cst_14 = arith.constant 1.000000e+00 : f32
    %31 = vector.broadcast %cst_14 : f32 to vector<8x128xf32>
    %32 = arith.addf %31, %30 : vector<8x128xf32>
    %33 = arith.divf %31, %32 : vector<8x128xf32>
    %c0_15 = arith.constant 0 : index
    %c0_16 = arith.constant 0 : index
    %c0_17 = arith.constant 0 : index
    %34 = vector.load %arg5[%c0_15, %c0_16, %c0_17] : memref<1x8x128xf32, #tpu.memory_space<vmem>>, vector<1x8x128xf32>
    %35 = vector.shape_cast %34 : vector<1x8x128xf32> to vector<8x128xf32>
    %36 = arith.mulf %25, %35 : vector<8x128xf32>
    %37 = arith.mulf %19, %27 : vector<8x128xf32>
    %38 = arith.addf %36, %37 : vector<8x128xf32>
    %39 = math.tanh %38 : vector<8x128xf32>
    %40 = arith.mulf %33, %39 : vector<8x128xf32>
    %c0_18 = arith.constant 0 : index
    %c0_19 = arith.constant 0 : index
    %c0_20 = arith.constant 0 : index
    %41 = vector.load %arg6[%c0_18, %c0_19, %c0_20] : memref<1x8x128xf32, #tpu.memory_space<vmem>>, vector<1x8x128xf32>
    %42 = vector.shape_cast %41 : vector<1x8x128xf32> to vector<8x128xf32>
    %43 = vector.shape_cast %40 : vector<8x128xf32> to vector<1x8x128xf32>
    tpu.vector_store %arg6[%c0_18, %c0_19, %c0_20], %43 {strides = array<i32>} : memref<1x8x128xf32, #tpu.memory_space<vmem>>, vector<1x8x128xf32>,
    %c0_21 = arith.constant 0 : index
    %c0_22 = arith.constant 0 : index
    %c0_23 = arith.constant 0 : index
    %44 = vector.load %arg7[%c0_21, %c0_22, %c0_23] : memref<1x8x128xf32, #tpu.memory_space<vmem>>, vector<1x8x128xf32>
    %45 = vector.shape_cast %44 : vector<1x8x128xf32> to vector<8x128xf32>
    %46 = vector.shape_cast %38 : vector<8x128xf32> to vector<1x8x128xf32>
    tpu.vector_store %arg7[%c0_21, %c0_22, %c0_23], %46 {strides = array<i32>} : memref<1x8x128xf32, #tpu.memory_space<vmem>>, vector<1x8x128xf32>,
    %c1_i32 = arith.constant 1 : i32
    %47 = arith.addi %arg0, %c1_i32 : i32
    %c3_i32 = arith.constant 3 : i32
    %48 = arith.cmpi slt, %47, %c3_i32 : i32
    %49 = arith.extui %48 : i1 to i32
    %c0_i32_24 = arith.constant 0 : i32
    %50 = arith.cmpi ne, %49, %c0_i32_24 : i32
    scf.if %50 {
      %c0_25 = arith.constant 0 : index
      %c0_26 = arith.constant 0 : index
      %51 = vector.load %arg8[%c0_25, %c0_26] : memref<8x256xf32, #tpu.memory_space<vmem>>, vector<8x128xf32>
      tpu.vector_store %arg8[%c0_25, %c0_26], %40 {strides = array<i32>} : memref<8x256xf32, #tpu.memory_space<vmem>>, vector<8x128xf32>,
    } else {
    }
    return
  }
  func.func @transform_0(%arg0: i32) -> (i32, i32) {
    %c0_i32 = arith.constant 0 : i32
    %c0_i32_0 = arith.constant 0 : i32
    %c0_i32_1 = arith.constant 0 : i32
    return %c0_i32, %c0_i32_0 : i32, i32
  }
  func.func @transform_1(%arg0: i32) -> (i32, i32, i32) {
    %c0_i32 = arith.constant 0 : i32
    %c0_i32_0 = arith.constant 0 : i32
    %c0_i32_1 = arith.constant 0 : i32
    return %arg0, %c0_i32, %c0_i32_0 : i32, i32, i32
  }
  func.func @transform_2(%arg0: i32) -> (i32, i32, i32) {
    %c0_i32 = arith.constant 0 : i32
    %c0_i32_0 = arith.constant 0 : i32
    %c0_i32_1 = arith.constant 0 : i32
    return %arg0, %c0_i32, %c0_i32_0 : i32, i32, i32
  }
  func.func @transform_3(%arg0: i32) -> (i32, i32, i32) {
    %c0_i32 = arith.constant 0 : i32
    %c0_i32_0 = arith.constant 0 : i32
    %c0_i32_1 = arith.constant 0 : i32
    return %arg0, %c0_i32, %c0_i32_0 : i32, i32, i32
  }
  func.func @transform_4(%arg0: i32) -> (i32, i32, i32) {
    %c0_i32 = arith.constant 0 : i32
    %c0_i32_0 = arith.constant 0 : i32
    %c0_i32_1 = arith.constant 0 : i32
    return %arg0, %c0_i32, %c0_i32_0 : i32, i32, i32
  }
  func.func @transform_5(%arg0: i32) -> (i32, i32, i32) {
    %c0_i32 = arith.constant 0 : i32
    %c0_i32_0 = arith.constant 0 : i32
    %c0_i32_1 = arith.constant 0 : i32
    return %arg0, %c0_i32, %c0_i32_0 : i32, i32, i32
  }
  func.func @transform_6(%arg0: i32) -> (i32, i32, i32) {
    %c0_i32 = arith.constant 0 : i32
    %c0_i32_0 = arith.constant 0 : i32
    %c0_i32_1 = arith.constant 0 : i32
    return %arg0, %c0_i32, %c0_i32_0 : i32, i32, i32
  }
}

</mosaic_0001>

<llo_original>
// kernel: tpu_custom_call.1
$region0: #{tpu_custom_call.1}
  #allocation0 [shape = 'u32[]', space=smem, size = 0x4, offset = 0x4, fixed_abs, tag = 'smem constant byte address 0x4 - core index']
  #allocation1 [shape = 'u32[72,128]{1,0:T(1,128)}', space=vmem, size = 0x9000, scoped, tag = 'internal scratch']
  #allocation2 [shape = 'f32[8,256]{1,0:T(8,128)}', space=vmem, size = 0x2000, scoped, tag = 'scratch operand']
  %s0 = inlined_call_operand.hbm [shape: f32[8,128], index: 0, kind: input, shape index: {}]
  %s1 = inlined_call_operand.hbm [shape: f32[3,256,512], index: 1, kind: input, shape index: {}]
  %s2 = inlined_call_operand.hbm [shape: f32[3,1,512], index: 2, kind: input, shape index: {}]
  %s3 = inlined_call_operand.hbm [shape: f32[3,8,128], index: 3, kind: input, shape index: {}]
  %s4 = inlined_call_operand.hbm [shape: f32[3,8,128], index: 4, kind: input, shape index: {}]
  %s5 = inlined_call_operand.hbm [shape: f32[3,8,128], index: 5, kind: output, shape index: {0}]
  %s6 = inlined_call_operand.hbm [shape: f32[3,8,128], index: 6, kind: output, shape index: {1}]
  %7 = xla_tuple %s5, %s6
  %s8 = sld [smem:[#allocation0]]
  $region89: #{tpu_custom_call.1} parent=0
    _
  %s10 = ssub.s32 1, %s8
  %s11 = scalar_select 0, %s10, %s8
  $region1: #{tpu_custom_call.1} parent=0
    #allocation3 [shape = 'u8[4096]{0}', space=vmem, size = 0x1000, scoped, tag = 'input window, operand 0, single buffered']
    #allocation4 [shape = 's32[2]{0}', space=sflag, size = 0x8, scoped, tag = 'scoped memory for tpu_custom_call.1']
    #allocation5 [shape = 's32[2]{0}', space=sflag, size = 0x8, scoped, tag = 'scoped memory for tpu_custom_call.1']
    #allocation6 [shape = 'u8[1048576]{0}', space=vmem, size = 0x100000, scoped, tag = 'input window, operand 1']
    #allocation7 [shape = 's32[2]{0}', space=sflag, size = 0x8, scoped, tag = 'scoped memory for tpu_custom_call.1']
    #allocation8 [shape = 'u8[4096]{0}', space=vmem, size = 0x1000, scoped, tag = 'input window, operand 2']
    #allocation9 [shape = 'u8[8192]{0}', space=vmem, size = 0x2000, scoped, tag = 'input window, operand 3']
    #allocation10 [shape = 's32[2]{0}', space=sflag, size = 0x8, scoped, tag = 'scoped memory for tpu_custom_call.1']
    #allocation11 [shape = 'u8[8192]{0}', space=vmem, size = 0x2000, scoped, tag = 'input window, operand 4']
    #allocation12 [shape = 'u8[8192]{0}', space=vmem, size = 0x2000, scoped, tag = 'output window, operand 0']
    #allocation13 [shape = 'u8[8192]{0}', space=vmem, size = 0x2000, scoped, tag = 'output window, operand 1']
    #allocation14 [shape = 's32[2]{0}', space=sflag, size = 0x8, scoped, tag = 'scoped memory for tpu_custom_call.1']
    %12 = vsyncpa [#allocation4], 0
    %13 = vsyncpa [#allocation7], 0
    %s14 = scalar_lea.sflag [#allocation7], 1
    %15 = vsyncpa %s14, 0
    %16 = vsyncpa [#allocation10], 0
    %s17 = scalar_lea.sflag [#allocation10], 1
    %18 = vsyncpa %s17, 0
    %19 = vsyncpa [#allocation5], 0
    %s20 = scalar_lea.sflag [#allocation5], 1
    %21 = vsyncpa %s20, 0
    %22 = vsyncpa [#allocation14], 0
    %s23 = scalar_lea.sflag [#allocation14], 1
    %24 = vsyncpa %s23, 0
    loop: start=0, step=1, limit=5
    $region2: #{tpu_custom_call.1} parent=1 // loop_pre_header
      _
    $region3: #{tpu_custom_call.1} parent=1 // loop_header
      %s26 = sphi 0, %s30
      %p27 = scmp.ge.s32.totalorder %s26, 5
      %s34 = sphi 0, %s34
      %s36 = sphi 0, %s34
      %s37 = sphi 0, %s36
      %s51 = sphi 0, %s37
      %s57 = sphi 0, %s59
      %s60 = sphi 0, %s57
      %s61 = sphi 0, %s60
      %s77 = sphi 0, %s61
      %s83 = sphi 0, %s85
      %s86 = sphi 0, %s83
      %s87 = sphi 0, %s86
      %s103 = sphi 0, %s87
      %s109 = sphi 0, %s111
      %s112 = sphi 0, %s109
      %s113 = sphi 0, %s112
      %s129 = sphi 0, %s113
      %s135 = sphi 0, %s137
      %s138 = sphi 0, %s135
      %s139 = sphi 0, %s138
      %s155 = sphi 0, %s139
      %s161 = sphi 0, %s163
      %s164 = sphi 0, %s161
      %s165 = sphi 0, %s164
      %s181 = sphi 0, %s165
      %s187 = sphi 0, %s189
      %s190 = sphi 0, %s187
      %s191 = sphi 0, %s190
      %s207 = sphi 0, %s191
    $region4: #{tpu_custom_call.1} parent=1 // loop_header_branch
      %29 = sbr.rel (%p27) target = $region8
    $region5: #{tpu_custom_call.1} parent=1 // loop_body
      %s31 = ssub.s32 %s26, 1
      %s32 = ssub.s32 %s26, 2
      %s33 = sadd.s32 %s26, 1
      %s35 = sadd.s32 %s34, 1
      %p38 = scmp.eq.s32.totalorder %s26, 2
      %p39 = scmp.ne.s32.totalorder %s34, %s36
      %p40 = scmp.eq.s32.totalorder %s26, 0
      %p41 = por %p39, %p40
      %p42 = scmp.ne.s32.totalorder %s34, %s36
      %p43 = scmp.eq.s32.totalorder %s31, 2
      %p44 = por %p42, %p43
      %p45 = scmp.ne.s32.totalorder %s36, %s37
      %p46 = scmp.eq.s32.totalorder %s31, 0
      %p47 = por %p45, %p46
      %p48 = scmp.ne.s32.totalorder %s36, %s37
      %p49 = scmp.eq.s32.totalorder %s32, 2
      %p50 = por %p48, %p49
      %p52 = scmp.ne.s32.totalorder %s37, %s51
      %p53 = scmp.eq.s32.totalorder %s32, 0
      %p54 = por %p52, %p53
      %s55 = ssub.s32 %s26, %s33
      %p56 = scmp.eq.s32.totalorder %s55, 0
      %s58 = sadd.s32 %s57, 1
      %s59 = scalar_select %p56, %s57, %s58
      %p62 = pneg %p56
      %p63 = scmp.eq.s32.totalorder %s26, 2
      %p64 = por %p62, %p63
      %p65 = scmp.ne.s32.totalorder %s57, %s60
      %p66 = scmp.eq.s32.totalorder %s26, 0
      %p67 = por %p65, %p66
      %p68 = scmp.ne.s32.totalorder %s57, %s60
      %p69 = scmp.eq.s32.totalorder %s31, 2
      %p70 = por %p68, %p69
      %p71 = scmp.ne.s32.totalorder %s60, %s61
      %p72 = scmp.eq.s32.totalorder %s31, 0
      %p73 = por %p71, %p72
      %p74 = scmp.ne.s32.totalorder %s60, %s61
      %p75 = scmp.eq.s32.totalorder %s32, 2
      %p76 = por %p74, %p75
      %p78 = scmp.ne.s32.totalorder %s61, %s77
      %p79 = scmp.eq.s32.totalorder %s32, 0
      %p80 = por %p78, %p79
      %s81 = ssub.s32 %s26, %s33
      %p82 = scmp.eq.s32.totalorder %s81, 0
      %s84 = sadd.s32 %s83, 1
      %s85 = scalar_select %p82, %s83, %s84
      %p88 = pneg %p82
      %p89 = scmp.eq.s32.totalorder %s26, 2
      %p90 = por %p88, %p89
      %p91 = scmp.ne.s32.totalorder %s83, %s86
      %p92 = scmp.eq.s32.totalorder %s26, 0
      %p93 = por %p91, %p92
      %p94 = scmp.ne.s32.totalorder %s83, %s86
      %p95 = scmp.eq.s32.totalorder %s31, 2
      %p96 = por %p94, %p95
      %p97 = scmp.ne.s32.totalorder %s86, %s87
      %p98 = scmp.eq.s32.totalorder %s31, 0
      %p99 = por %p97, %p98
      %p100 = scmp.ne.s32.totalorder %s86, %s87
      %p101 = scmp.eq.s32.totalorder %s32, 2
      %p102 = por %p100, %p101
      %p104 = scmp.ne.s32.totalorder %s87, %s103
      %p105 = scmp.eq.s32.totalorder %s32, 0
      %p106 = por %p104, %p105
      %s107 = ssub.s32 %s26, %s33
      %p108 = scmp.eq.s32.totalorder %s107, 0
      %s110 = sadd.s32 %s109, 1
      %s111 = scalar_select %p108, %s109, %s110
      %p114 = pneg %p108
      %p115 = scmp.eq.s32.totalorder %s26, 2
      %p116 = por %p114, %p115
      %p117 = scmp.ne.s32.totalorder %s109, %s112
      %p118 = scmp.eq.s32.totalorder %s26, 0
      %p119 = por %p117, %p118
      %p120 = scmp.ne.s32.totalorder %s109, %s112
      %p121 = scmp.eq.s32.totalorder %s31, 2
      %p122 = por %p120, %p121
      %p123 = scmp.ne.s32.totalorder %s112, %s113
      %p124 = scmp.eq.s32.totalorder %s31, 0
      %p125 = por %p123, %p124
      %p126 = scmp.ne.s32.totalorder %s112, %s113
      %p127 = scmp.eq.s32.totalorder %s32, 2
      %p128 = por %p126, %p127
      %p130 = scmp.ne.s32.totalorder %s113, %s129
      %p131 = scmp.eq.s32.totalorder %s32, 0
      %p132 = por %p130, %p131
      %s133 = ssub.s32 %s26, %s33
      %p134 = scmp.eq.s32.totalorder %s133, 0
      %s136 = sadd.s32 %s135, 1
      %s137 = scalar_select %p134, %s135, %s136
      %p140 = pneg %p134
      %p141 = scmp.eq.s32.totalorder %s26, 2
      %p142 = por %p140, %p141
      %p143 = scmp.ne.s32.totalorder %s135, %s138
      %p144 = scmp.eq.s32.totalorder %s26, 0
      %p145 = por %p143, %p144
      %p146 = scmp.ne.s32.totalorder %s135, %s138
      %p147 = scmp.eq.s32.totalorder %s31, 2
      %p148 = por %p146, %p147
      %p149 = scmp.ne.s32.totalorder %s138, %s139
      %p150 = scmp.eq.s32.totalorder %s31, 0
      %p151 = por %p149, %p150
      %p152 = scmp.ne.s32.totalorder %s138, %s139
      %p153 = scmp.eq.s32.totalorder %s32, 2
      %p154 = por %p152, %p153
      %p156 = scmp.ne.s32.totalorder %s139, %s155
      %p157 = scmp.eq.s32.totalorder %s32, 0
      %p158 = por %p156, %p157
      %s159 = ssub.s32 %s26, %s33
      %p160 = scmp.eq.s32.totalorder %s159, 0
      %s162 = sadd.s32 %s161, 1
      %s163 = scalar_select %p160, %s161, %s162
      %p166 = pneg %p160
      %p167 = scmp.eq.s32.totalorder %s26, 2
      %p168 = por %p166, %p167
      %p169 = scmp.ne.s32.totalorder %s161, %s164
      %p170 = scmp.eq.s32.totalorder %s26, 0
      %p171 = por %p169, %p170
      %p172 = scmp.ne.s32.totalorder %s161, %s164
      %p173 = scmp.eq.s32.totalorder %s31, 2
      %p174 = por %p172, %p173
      %p175 = scmp.ne.s32.totalorder %s164, %s165
      %p176 = scmp.eq.s32.totalorder %s31, 0
      %p177 = por %p175, %p176
      %p178 = scmp.ne.s32.totalorder %s164, %s165
      %p179 = scmp.eq.s32.totalorder %s32, 2
      %p180 = por %p178, %p179
      %p182 = scmp.ne.s32.totalorder %s165, %s181
      %p183 = scmp.eq.s32.totalorder %s32, 0
      %p184 = por %p182, %p183
      %s185 = ssub.s32 %s26, %s33
      %p186 = scmp.eq.s32.totalorder %s185, 0
      %s188 = sadd.s32 %s187, 1
      %s189 = scalar_select %p186, %s187, %s188
      %p192 = pneg %p186
      %p193 = scmp.eq.s32.totalorder %s26, 2
      %p194 = por %p192, %p193
      %p195 = scmp.ne.s32.totalorder %s187, %s190
      %p196 = scmp.eq.s32.totalorder %s26, 0
      %p197 = por %p195, %p196
      %p198 = scmp.ne.s32.totalorder %s187, %s190
      %p199 = scmp.eq.s32.totalorder %s31, 2
      %p200 = por %p198, %p199
      %p201 = scmp.ne.s32.totalorder %s190, %s191
      %p202 = scmp.eq.s32.totalorder %s31, 0
      %p203 = por %p201, %p202
      %p204 = scmp.ne.s32.totalorder %s190, %s191
      %p205 = scmp.eq.s32.totalorder %s32, 2
      %p206 = por %p204, %p205
      %p208 = scmp.ne.s32.totalorder %s191, %s207
      %p209 = scmp.eq.s32.totalorder %s32, 0
      %p210 = por %p208, %p209
      %p211 = scmp.le.s32.totalorder 1, %s26
      %p212 = scmp.lt.s32.totalorder %s26, 4
      %p213 = pnand %p211, %p212
      %p214 = pneg %p213
      // Predicated region
      $region9: #{tpu_custom_call.1} parent=5 // pred_check
        _
      $region10: #{tpu_custom_call.1} parent=5 // pred_check_branch
        %216 = sbr.rel (%p213) target = $region12
      $region11: #{tpu_custom_call.1} parent=5 // pred_region
        %s217 = ssub.s32 %s26, 1
        // Predicated region
        $region13: #{tpu_custom_call.1} parent=11 // pred_check
          %p218 = pneg %p47
        $region14: #{tpu_custom_call.1} parent=11 // pred_check_branch
          %220 = sbr.rel (%p218) target = $region16
        $region15: #{tpu_custom_call.1} parent=11 // pred_region
          %222 = vsyncadd [#allocation4], 0
          %s224 = sshll.u32 %s0, 4
          %s225 = int_to_ptr.hbm [resolvable:$true] %s224
          %s226 = sshll.u32 [#allocation3], 4
          %s227 = int_to_ptr.vmem [resolvable:$true] %s226
          %229 = dma.hbm_to_vmem [thread:$0]  %s225, 128, %s227, [#allocation4]
        $region16: #{tpu_custom_call.1} parent=11 // pred_fallthru
          _
      $region12: #{tpu_custom_call.1} parent=5 // pred_fallthru
        _
      %p230 = scmp.lt.s32.totalorder %s26, 3
      // Predicated region
      $region17: #{tpu_custom_call.1} parent=5 // pred_check
        %p231 = pneg %p230
      $region18: #{tpu_custom_call.1} parent=5 // pred_check_branch
        %233 = sbr.rel (%p231) target = $region20
      $region19: #{tpu_custom_call.1} parent=5 // pred_region
        // Predicated region
        $region21: #{tpu_custom_call.1} parent=19 // pred_check
          %p234 = pneg %p67
        $region22: #{tpu_custom_call.1} parent=19 // pred_check_branch
          %236 = sbr.rel (%p234) target = $region24
        $region23: #{tpu_custom_call.1} parent=19 // pred_region
          %s237 = sand.u32 %s26, 1
          %s238 = scalar_lea.sflag [#allocation7], %s237
          %s239 = sand.u32 %s57, 1
          %s240 = smul.addr %s239, 1024
          %s241 = scalar_lea.vmem [#allocation6], %s240
          %243 = vsyncadd %s238, 0
          %s244 = smul.addr %s26, 128
          %s245 = smul.addr %s244, 8
          %s246 = scalar_lea.hbm %s1, %s245
          %s247 = sshll.u32 %s246, 4
          %s248 = int_to_ptr.hbm [resolvable:$true] %s247
          %s249 = sshll.u32 %s241, 4
          %s250 = int_to_ptr.vmem [resolvable:$true] %s249
          %255 = dma.hbm_to_vmem [thread:$0]  %s248, 16384, %s250, %s238, 512, 512, 32
        $region24: #{tpu_custom_call.1} parent=19 // pred_fallthru
          _
        // Predicated region
        $region25: #{tpu_custom_call.1} parent=19 // pred_check
          %p256 = pneg %p93
        $region26: #{tpu_custom_call.1} parent=19 // pred_check_branch
          %258 = sbr.rel (%p256) target = $region28
        $region27: #{tpu_custom_call.1} parent=19 // pred_region
          %s259 = sand.u32 %s26, 1
          %s260 = scalar_lea.sflag [#allocation7], %s259
          %s261 = sand.u32 %s83, 1
          %s262 = smul.addr %s261, 4
          %s263 = scalar_lea.vmem [#allocation8], %s262
          %265 = vsyncadd %s260, 0
          %s266 = smul.addr %s26, 4
          %s267 = scalar_lea.hbm %s2, %s266
          %s269 = sshll.u32 %s267, 4
          %s270 = int_to_ptr.hbm [resolvable:$true] %s269
          %s271 = sshll.u32 %s263, 4
          %s272 = int_to_ptr.vmem [resolvable:$true] %s271
          %274 = dma.hbm_to_vmem [thread:$0]  %s270, 64, %s272, %s260
        $region28: #{tpu_custom_call.1} parent=19 // pred_fallthru
          _
        // Predicated region
        $region29: #{tpu_custom_call.1} parent=19 // pred_check
          %p275 = pneg %p119
        $region30: #{tpu_custom_call.1} parent=19 // pred_check_branch
          %277 = sbr.rel (%p275) target = $region32
        $region31: #{tpu_custom_call.1} parent=19 // pred_region
          %s278 = sand.u32 %s26, 1
          %s279 = scalar_lea.sflag [#allocation10], %s278
          %s280 = sand.u32 %s109, 1
          %s281 = smul.addr %s280, 8
          %s282 = scalar_lea.vmem [#allocation9], %s281
          %284 = vsyncadd %s279, 0
          %s285 = smul.addr %s26, 8
          %s286 = scalar_lea.hbm %s3, %s285
          %s288 = sshll.u32 %s286, 4
          %s289 = int_to_ptr.hbm [resolvable:$true] %s288
          %s290 = sshll.u32 %s282, 4
          %s291 = int_to_ptr.vmem [resolvable:$true] %s290
          %293 = dma.hbm_to_vmem [thread:$0]  %s289, 128, %s291, %s279
        $region32: #{tpu_custom_call.1} parent=19 // pred_fallthru
          _
        // Predicated region
        $region33: #{tpu_custom_call.1} parent=19 // pred_check
          %p294 = pneg %p145
        $region34: #{tpu_custom_call.1} parent=19 // pred_check_branch
          %296 = sbr.rel (%p294) target = $region36
        $region35: #{tpu_custom_call.1} parent=19 // pred_region
          %s297 = sand.u32 %s26, 1
          %s298 = scalar_lea.sflag [#allocation10], %s297
          %s299 = sand.u32 %s135, 1
          %s300 = smul.addr %s299, 8
          %s301 = scalar_lea.vmem [#allocation11], %s300
          %303 = vsyncadd %s298, 0
          %s304 = smul.addr %s26, 8
          %s305 = scalar_lea.hbm %s4, %s304
          %s307 = sshll.u32 %s305, 4
          %s308 = int_to_ptr.hbm [resolvable:$true] %s307
          %s309 = sshll.u32 %s301, 4
          %s310 = int_to_ptr.vmem [resolvable:$true] %s309
          %312 = dma.hbm_to_vmem [thread:$0]  %s308, 128, %s310, %s298
        $region36: #{tpu_custom_call.1} parent=19 // pred_fallthru
          _
      $region20: #{tpu_custom_call.1} parent=5 // pred_fallthru
        _
      %p313 = scmp.le.s32.totalorder 1, %s26
      %p314 = scmp.lt.s32.totalorder %s26, 4
      %p315 = pnand %p313, %p314
      %p316 = pneg %p315
      // Predicated region
      $region37: #{tpu_custom_call.1} parent=5 // pred_check
        _
      $region38: #{tpu_custom_call.1} parent=5 // pred_check_branch
        %318 = sbr.rel (%p315) target = $region40
      $region39: #{tpu_custom_call.1} parent=5 // pred_region
        %s319 = ssub.s32 %s26, 1
        // Predicated region
        $region41: #{tpu_custom_call.1} parent=39 // pred_check
          %p320 = pneg %p47
        $region42: #{tpu_custom_call.1} parent=39 // pred_check_branch
          %322 = sbr.rel (%p320) target = $region44
        $region43: #{tpu_custom_call.1} parent=39 // pred_region
          %324 = dma.done [#allocation4], 128
        $region44: #{tpu_custom_call.1} parent=39 // pred_fallthru
          _
        %s325 = sand.u32 %s31, 1
        %s326 = scalar_lea.sflag [#allocation7], %s325
        %s327 = sand.u32 %s60, 1
        %s328 = smul.addr %s327, 1024
        %s329 = scalar_lea.vmem [#allocation6], %s328
        // Predicated region
        $region45: #{tpu_custom_call.1} parent=39 // pred_check
          %p330 = pneg %p73
        $region46: #{tpu_custom_call.1} parent=39 // pred_check_branch
          %332 = sbr.rel (%p330) target = $region48
        $region47: #{tpu_custom_call.1} parent=39 // pred_region
          %334 = dma.done %s326, 16384
        $region48: #{tpu_custom_call.1} parent=39 // pred_fallthru
          _
        %s335 = sand.u32 %s31, 1
        %s336 = scalar_lea.sflag [#allocation7], %s335
        %s337 = sand.u32 %s86, 1
        %s338 = smul.addr %s337, 4
        %s339 = scalar_lea.vmem [#allocation8], %s338
        // Predicated region
        $region49: #{tpu_custom_call.1} parent=39 // pred_check
          %p340 = pneg %p99
        $region50: #{tpu_custom_call.1} parent=39 // pred_check_branch
          %342 = sbr.rel (%p340) target = $region52
        $region51: #{tpu_custom_call.1} parent=39 // pred_region
          %344 = dma.done %s336, 64
        $region52: #{tpu_custom_call.1} parent=39 // pred_fallthru
          _
        %s345 = sand.u32 %s31, 1
        %s346 = scalar_lea.sflag [#allocation10], %s345
        %s347 = sand.u32 %s112, 1
        %s348 = smul.addr %s347, 8
        %s349 = scalar_lea.vmem [#allocation9], %s348
        // Predicated region
        $region53: #{tpu_custom_call.1} parent=39 // pred_check
          %p350 = pneg %p125
        $region54: #{tpu_custom_call.1} parent=39 // pred_check_branch
          %352 = sbr.rel (%p350) target = $region56
        $region55: #{tpu_custom_call.1} parent=39 // pred_region
          %354 = dma.done %s346, 128
        $region56: #{tpu_custom_call.1} parent=39 // pred_fallthru
          _
        %s355 = sand.u32 %s31, 1
        %s356 = scalar_lea.sflag [#allocation10], %s355
        %s357 = sand.u32 %s138, 1
        %s358 = smul.addr %s357, 8
        %s359 = scalar_lea.vmem [#allocation11], %s358
        // Predicated region
        $region57: #{tpu_custom_call.1} parent=39 // pred_check
          %p360 = pneg %p151
        $region58: #{tpu_custom_call.1} parent=39 // pred_check_branch
          %362 = sbr.rel (%p360) target = $region60
        $region59: #{tpu_custom_call.1} parent=39 // pred_region
          %364 = dma.done %s356, 128
        $region60: #{tpu_custom_call.1} parent=39 // pred_fallthru
          _
        %p365 = pneg %p47
        %p366 = pneg %p44
        %s367 = sand.u32 %s31, 1
        %s368 = scalar_lea.sflag [#allocation7], %s367
        %s369 = sand.u32 %s60, 1
        %s370 = smul.addr %s369, 1024
        %s371 = scalar_lea.vmem [#allocation6], %s370
        %p372 = pneg %p73
        %p373 = pneg %p70
        %s374 = sand.u32 %s31, 1
        %s375 = scalar_lea.sflag [#allocation7], %s374
        %s376 = sand.u32 %s86, 1
        %s377 = smul.addr %s376, 4
        %s378 = scalar_lea.vmem [#allocation8], %s377
        %p379 = pneg %p99
        %p380 = pneg %p96
        %s381 = sand.u32 %s31, 1
        %s382 = scalar_lea.sflag [#allocation10], %s381
        %s383 = sand.u32 %s112, 1
        %s384 = smul.addr %s383, 8
        %s385 = scalar_lea.vmem [#allocation9], %s384
        %p386 = pneg %p125
        %p387 = pneg %p122
        %s388 = sand.u32 %s31, 1
        %s389 = scalar_lea.sflag [#allocation10], %s388
        %s390 = sand.u32 %s138, 1
        %s391 = smul.addr %s390, 8
        %s392 = scalar_lea.vmem [#allocation11], %s391
        %p393 = pneg %p151
        %p394 = pneg %p148
        %p395 = pneg %p177
        %p396 = pneg %p174
        %s397 = sand.u32 %s164, 1
        %s398 = scalar_lea.sflag [#allocation5], %s397
        %s399 = sand.u32 %s164, 1
        %s400 = smul.addr %s399, 8
        %s401 = scalar_lea.vmem [#allocation12], %s400
        %p402 = pneg %p203
        %p403 = pneg %p200
        %s404 = sand.u32 %s190, 1
        %s405 = scalar_lea.sflag [#allocation14], %s404
        %s406 = sand.u32 %s190, 1
        %s407 = smul.addr %s406, 8
        %s408 = scalar_lea.vmem [#allocation13], %s407
        %p409 = scmp.eq.s32.totalorder %s31, 0
        // Predicated region
        $region61: #{tpu_custom_call.1} parent=39 // pred_check
          %p410 = pneg %p409
        $region62: #{tpu_custom_call.1} parent=39 // pred_check_branch
          %412 = sbr.rel (%p410) target = $region64
        $region63: #{tpu_custom_call.1} parent=39 // pred_region
          %v413 = vld [vmem:[#allocation3] sm:$0xff]
          %414 = vst [vmem:[#allocation2] sm:$0xff] %v413
        $region64: #{tpu_custom_call.1} parent=39 // pred_fallthru
          _
        %v415 = vld [vmem:[%s349] sm:$0xff]
        %416 = vst [vmem:[#allocation2 + $0x8] sm:$0xff] %v415
        %v417 = vld [vmem:[#allocation2] sm:$0xff]
        %v418 = vld [vmem:[#allocation2 + $0x8] sm:$0xff]
        %v419 = vld [vmem:[%s329] sm:$0xff]
        %v420 = vld [vmem:[%s329 + $0x8] sm:$0xff]
        %v421 = vld [vmem:[%s329 + $0x10] sm:$0xff]
        %v422 = vld [vmem:[%s329 + $0x18] sm:$0xff]
        %v423 = vld [vmem:[%s329 + $0x20] sm:$0xff]
        %v424 = vld [vmem:[%s329 + $0x28] sm:$0xff]
        %v425 = vld [vmem:[%s329 + $0x30] sm:$0xff]
        %v426 = vld [vmem:[%s329 + $0x38] sm:$0xff]
        %v427 = vld [vmem:[%s329 + $0x40] sm:$0xff]
        %v428 = vld [vmem:[%s329 + $0x48] sm:$0xff]
        %v429 = vld [vmem:[%s329 + $0x50] sm:$0xff]
        %v430 = vld [vmem:[%s329 + $0x58] sm:$0xff]
        %v431 = vld [vmem:[%s329 + $0x60] sm:$0xff]
        %v432 = vld [vmem:[%s329 + $0x68] sm:$0xff]
        %v433 = vld [vmem:[%s329 + $0x70] sm:$0xff]
        %v434 = vld [vmem:[%s329 + $0x78] sm:$0xff]
        %v435 = vld [vmem:[%s329 + $0x80] sm:$0xff]
        %v436 = vld [vmem:[%s329 + $0x88] sm:$0xff]
        %v437 = vld [vmem:[%s329 + $0x90] sm:$0xff]
        %v438 = vld [vmem:[%s329 + $0x98] sm:$0xff]
        %v439 = vld [vmem:[%s329 + $0xa0] sm:$0xff]
        %v440 = vld [vmem:[%s329 + $0xa8] sm:$0xff]
        %v441 = vld [vmem:[%s329 + $0xb0] sm:$0xff]
        %v442 = vld [vmem:[%s329 + $0xb8] sm:$0xff]
        %v443 = vld [vmem:[%s329 + $0xc0] sm:$0xff]
        %v444 = vld [vmem:[%s329 + $0xc8] sm:$0xff]
        %v445 = vld [vmem:[%s329 + $0xd0] sm:$0xff]
        %v446 = vld [vmem:[%s329 + $0xd8] sm:$0xff]
        %v447 = vld [vmem:[%s329 + $0xe0] sm:$0xff]
        %v448 = vld [vmem:[%s329 + $0xe8] sm:$0xff]
        %v449 = vld [vmem:[%s329 + $0xf0] sm:$0xff]
        %v450 = vld [vmem:[%s329 + $0xf8] sm:$0xff]
        %v451 = vld [vmem:[%s329 + $0x100] sm:$0xff]
        %v452 = vld [vmem:[%s329 + $0x108] sm:$0xff]
        %v453 = vld [vmem:[%s329 + $0x110] sm:$0xff]
        %v454 = vld [vmem:[%s329 + $0x118] sm:$0xff]
        %v455 = vld [vmem:[%s329 + $0x120] sm:$0xff]
        %v456 = vld [vmem:[%s329 + $0x128] sm:$0xff]
        %v457 = vld [vmem:[%s329 + $0x130] sm:$0xff]
        %v458 = vld [vmem:[%s329 + $0x138] sm:$0xff]
        %v459 = vld [vmem:[%s329 + $0x140] sm:$0xff]
        %v460 = vld [vmem:[%s329 + $0x148] sm:$0xff]
        %v461 = vld [vmem:[%s329 + $0x150] sm:$0xff]
        %v462 = vld [vmem:[%s329 + $0x158] sm:$0xff]
        %v463 = vld [vmem:[%s329 + $0x160] sm:$0xff]
        %v464 = vld [vmem:[%s329 + $0x168] sm:$0xff]
        %v465 = vld [vmem:[%s329 + $0x170] sm:$0xff]
        %v466 = vld [vmem:[%s329 + $0x178] sm:$0xff]
        %v467 = vld [vmem:[%s329 + $0x180] sm:$0xff]
        %v468 = vld [vmem:[%s329 + $0x188] sm:$0xff]
        %v469 = vld [vmem:[%s329 + $0x190] sm:$0xff]
        %v470 = vld [vmem:[%s329 + $0x198] sm:$0xff]
        %v471 = vld [vmem:[%s329 + $0x1a0] sm:$0xff]
        %v472 = vld [vmem:[%s329 + $0x1a8] sm:$0xff]
        %v473 = vld [vmem:[%s329 + $0x1b0] sm:$0xff]
        %v474 = vld [vmem:[%s329 + $0x1b8] sm:$0xff]
        %v475 = vld [vmem:[%s329 + $0x1c0] sm:$0xff]
        %v476 = vld [vmem:[%s329 + $0x1c8] sm:$0xff]
        %v477 = vld [vmem:[%s329 + $0x1d0] sm:$0xff]
        %v478 = vld [vmem:[%s329 + $0x1d8] sm:$0xff]
        %v479 = vld [vmem:[%s329 + $0x1e0] sm:$0xff]
        %v480 = vld [vmem:[%s329 + $0x1e8] sm:$0xff]
        %v481 = vld [vmem:[%s329 + $0x1f0] sm:$0xff]
        %v482 = vld [vmem:[%s329 + $0x1f8] sm:$0xff]
        %v483 = vld [vmem:[%s329 + $0x200] sm:$0xff]
        %v484 = vld [vmem:[%s329 + $0x208] sm:$0xff]
        %v485 = vld [vmem:[%s329 + $0x210] sm:$0xff]
        %v486 = vld [vmem:[%s329 + $0x218] sm:$0xff]
        %v487 = vld [vmem:[%s329 + $0x220] sm:$0xff]
        %v488 = vld [vmem:[%s329 + $0x228] sm:$0xff]
        %v489 = vld [vmem:[%s329 + $0x230] sm:$0xff]
        %v490 = vld [vmem:[%s329 + $0x238] sm:$0xff]
        %v491 = vld [vmem:[%s329 + $0x240] sm:$0xff]
        %v492 = vld [vmem:[%s329 + $0x248] sm:$0xff]
        %v493 = vld [vmem:[%s329 + $0x250] sm:$0xff]
        %v494 = vld [vmem:[%s329 + $0x258] sm:$0xff]
        %v495 = vld [vmem:[%s329 + $0x260] sm:$0xff]
        %v496 = vld [vmem:[%s329 + $0x268] sm:$0xff]
        %v497 = vld [vmem:[%s329 + $0x270] sm:$0xff]
        %v498 = vld [vmem:[%s329 + $0x278] sm:$0xff]
        %v499 = vld [vmem:[%s329 + $0x280] sm:$0xff]
        %v500 = vld [vmem:[%s329 + $0x288] sm:$0xff]
        %v501 = vld [vmem:[%s329 + $0x290] sm:$0xff]
        %v502 = vld [vmem:[%s329 + $0x298] sm:$0xff]
        %v503 = vld [vmem:[%s329 + $0x2a0] sm:$0xff]
        %v504 = vld [vmem:[%s329 + $0x2a8] sm:$0xff]
        %v505 = vld [vmem:[%s329 + $0x2b0] sm:$0xff]
        %v506 = vld [vmem:[%s329 + $0x2b8] sm:$0xff]
        %v507 = vld [vmem:[%s329 + $0x2c0] sm:$0xff]
        %v508 = vld [vmem:[%s329 + $0x2c8] sm:$0xff]
        %v509 = vld [vmem:[%s329 + $0x2d0] sm:$0xff]
        %v510 = vld [vmem:[%s329 + $0x2d8] sm:$0xff]
        %v511 = vld [vmem:[%s329 + $0x2e0] sm:$0xff]
        %v512 = vld [vmem:[%s329 + $0x2e8] sm:$0xff]
        %v513 = vld [vmem:[%s329 + $0x2f0] sm:$0xff]
        %v514 = vld [vmem:[%s329 + $0x2f8] sm:$0xff]
        %v515 = vld [vmem:[%s329 + $0x300] sm:$0xff]
        %v516 = vld [vmem:[%s329 + $0x308] sm:$0xff]
        %v517 = vld [vmem:[%s329 + $0x310] sm:$0xff]
        %v518 = vld [vmem:[%s329 + $0x318] sm:$0xff]
        %v519 = vld [vmem:[%s329 + $0x320] sm:$0xff]
        %v520 = vld [vmem:[%s329 + $0x328] sm:$0xff]
        %v521 = vld [vmem:[%s329 + $0x330] sm:$0xff]
        %v522 = vld [vmem:[%s329 + $0x338] sm:$0xff]
        %v523 = vld [vmem:[%s329 + $0x340] sm:$0xff]
        %v524 = vld [vmem:[%s329 + $0x348] sm:$0xff]
        %v525 = vld [vmem:[%s329 + $0x350] sm:$0xff]
        %v526 = vld [vmem:[%s329 + $0x358] sm:$0xff]
        %v527 = vld [vmem:[%s329 + $0x360] sm:$0xff]
        %v528 = vld [vmem:[%s329 + $0x368] sm:$0xff]
        %v529 = vld [vmem:[%s329 + $0x370] sm:$0xff]
        %v530 = vld [vmem:[%s329 + $0x378] sm:$0xff]
        %v531 = vld [vmem:[%s329 + $0x380] sm:$0xff]
        %v532 = vld [vmem:[%s329 + $0x388] sm:$0xff]
        %v533 = vld [vmem:[%s329 + $0x390] sm:$0xff]
        %v534 = vld [vmem:[%s329 + $0x398] sm:$0xff]
        %v535 = vld [vmem:[%s329 + $0x3a0] sm:$0xff]
        %v536 = vld [vmem:[%s329 + $0x3a8] sm:$0xff]
        %v537 = vld [vmem:[%s329 + $0x3b0] sm:$0xff]
        %v538 = vld [vmem:[%s329 + $0x3b8] sm:$0xff]
        %v539 = vld [vmem:[%s329 + $0x3c0] sm:$0xff]
        %v540 = vld [vmem:[%s329 + $0x3c8] sm:$0xff]
        %v541 = vld [vmem:[%s329 + $0x3d0] sm:$0xff]
        %v542 = vld [vmem:[%s329 + $0x3d8] sm:$0xff]
        %v543 = vld [vmem:[%s329 + $0x3e0] sm:$0xff]
        %v544 = vld [vmem:[%s329 + $0x3e8] sm:$0xff]
        %v545 = vld [vmem:[%s329 + $0x3f0] sm:$0xff]
        %v546 = vld [vmem:[%s329 + $0x3f8] sm:$0xff]
        %v547 = vld [vmem:[%s339] sm:$0xf]
        %v549 = vperm.slane %v547, 0
        %v550 = vperm.slane %v547, 1
        %v551 = vperm.slane %v547, 2
        %v552 = vperm.slane %v547, 3
        %557 = vmatpush.msra.mxu0 %v479
        %558 = vmatpush.msra.mxu0 %v475
        %559 = vmatpush.msra.mxu0 %v471
        %560 = vmatpush.msra.mxu0 %v467
        %561 = vmatpush.msra.mxu0 %v463
        %562 = vmatpush.msra.mxu0 %v459
        %563 = vmatpush.msra.mxu0 %v455
        %564 = vmatpush.msra.mxu0 %v451
        %565 = vmatpush.msra.mxu0 %v447
        %566 = vmatpush.msra.mxu0 %v443
        %567 = vmatpush.msra.mxu0 %v439
        %568 = vmatpush.msra.mxu0 %v435
        %569 = vmatpush.msra.mxu0 %v431
        %570 = vmatpush.msra.mxu0 %v427
        %571 = vmatpush.msra.mxu0 %v423
        %572 = vmatpush.msra.mxu0 %v419
        %573 = vmatmul.f32.gmra.mxu0 %v417
        %v574 = vpop.f32.mrf.mxu0
        %v575 = vadd.f32 %v549, %v574
        %576 = vdwg.mxu0
        %577 = vmatpush.msra.mxu0 %v543
        %578 = vmatpush.msra.mxu0 %v539
        %579 = vmatpush.msra.mxu0 %v535
        %580 = vmatpush.msra.mxu0 %v531
        %581 = vmatpush.msra.mxu0 %v527
        %582 = vmatpush.msra.mxu0 %v523
        %583 = vmatpush.msra.mxu0 %v519
        %584 = vmatpush.msra.mxu0 %v515
        %585 = vmatpush.msra.mxu0 %v511
        %586 = vmatpush.msra.mxu0 %v507
        %587 = vmatpush.msra.mxu0 %v503
        %588 = vmatpush.msra.mxu0 %v499
        %589 = vmatpush.msra.mxu0 %v495
        %590 = vmatpush.msra.mxu0 %v491
        %591 = vmatpush.msra.mxu0 %v487
        %592 = vmatpush.msra.mxu0 %v483
        %593 = vmatmul.f32.gmra.mxu0 %v418
        %v594 = vpop.f32.mrf.mxu0
        %v595 = vadd.f32 %v575, %v594
        %596 = vdwg.mxu0
        %597 = vmatpush.msra.mxu0 %v480
        %598 = vmatpush.msra.mxu0 %v476
        %599 = vmatpush.msra.mxu0 %v472
        %600 = vmatpush.msra.mxu0 %v468
        %601 = vmatpush.msra.mxu0 %v464
        %602 = vmatpush.msra.mxu0 %v460
        %603 = vmatpush.msra.mxu0 %v456
        %604 = vmatpush.msra.mxu0 %v452
        %605 = vmatpush.msra.mxu0 %v448
        %606 = vmatpush.msra.mxu0 %v444
        %607 = vmatpush.msra.mxu0 %v440
        %608 = vmatpush.msra.mxu0 %v436
        %609 = vmatpush.msra.mxu0 %v432
        %610 = vmatpush.msra.mxu0 %v428
        %611 = vmatpush.msra.mxu0 %v424
        %612 = vmatpush.msra.mxu0 %v420
        %613 = vmatmul.f32.gmra.mxu0 %v417
        %v614 = vpop.f32.mrf.mxu0
        %v615 = vadd.f32 %v550, %v614
        %616 = vdwg.mxu0
        %617 = vmatpush.msra.mxu0 %v544
        %618 = vmatpush.msra.mxu0 %v540
        %619 = vmatpush.msra.mxu0 %v536
        %620 = vmatpush.msra.mxu0 %v532
        %621 = vmatpush.msra.mxu0 %v528
        %622 = vmatpush.msra.mxu0 %v524
        %623 = vmatpush.msra.mxu0 %v520
        %624 = vmatpush.msra.mxu0 %v516
        %625 = vmatpush.msra.mxu0 %v512
        %626 = vmatpush.msra.mxu0 %v508
        %627 = vmatpush.msra.mxu0 %v504
        %628 = vmatpush.msra.mxu0 %v500
        %629 = vmatpush.msra.mxu0 %v496
        %630 = vmatpush.msra.mxu0 %v492
        %631 = vmatpush.msra.mxu0 %v488
        %632 = vmatpush.msra.mxu0 %v484
        %633 = vmatmul.f32.gmra.mxu0 %v418
        %v634 = vpop.f32.mrf.mxu0
        %v635 = vadd.f32 %v615, %v634
        %636 = vdwg.mxu0
        %637 = vmatpush.msra.mxu0 %v481
        %638 = vmatpush.msra.mxu0 %v477
        %639 = vmatpush.msra.mxu0 %v473
        %640 = vmatpush.msra.mxu0 %v469
        %641 = vmatpush.msra.mxu0 %v465
        %642 = vmatpush.msra.mxu0 %v461
        %643 = vmatpush.msra.mxu0 %v457
        %644 = vmatpush.msra.mxu0 %v453
        %645 = vmatpush.msra.mxu0 %v449
        %646 = vmatpush.msra.mxu0 %v445
        %647 = vmatpush.msra.mxu0 %v441
        %648 = vmatpush.msra.mxu0 %v437
        %649 = vmatpush.msra.mxu0 %v433
        %650 = vmatpush.msra.mxu0 %v429
        %651 = vmatpush.msra.mxu0 %v425
        %652 = vmatpush.msra.mxu0 %v421
        %653 = vmatmul.f32.gmra.mxu0 %v417
        %v654 = vpop.f32.mrf.mxu0
        %v655 = vadd.f32 %v551, %v654
        %656 = vdwg.mxu0
        %657 = vmatpush.msra.mxu0 %v545
        %658 = vmatpush.msra.mxu0 %v541
        %659 = vmatpush.msra.mxu0 %v537
        %660 = vmatpush.msra.mxu0 %v533
        %661 = vmatpush.msra.mxu0 %v529
        %662 = vmatpush.msra.mxu0 %v525
        %663 = vmatpush.msra.mxu0 %v521
        %664 = vmatpush.msra.mxu0 %v517
        %665 = vmatpush.msra.mxu0 %v513
        %666 = vmatpush.msra.mxu0 %v509
        %667 = vmatpush.msra.mxu0 %v505
        %668 = vmatpush.msra.mxu0 %v501
        %669 = vmatpush.msra.mxu0 %v497
        %670 = vmatpush.msra.mxu0 %v493
        %671 = vmatpush.msra.mxu0 %v489
        %672 = vmatpush.msra.mxu0 %v485
        %673 = vmatmul.f32.gmra.mxu0 %v418
        %v674 = vpop.f32.mrf.mxu0
        %v675 = vadd.f32 %v655, %v674
        %676 = vdwg.mxu0
        %677 = vmatpush.msra.mxu0 %v482
        %678 = vmatpush.msra.mxu0 %v478
        %679 = vmatpush.msra.mxu0 %v474
        %680 = vmatpush.msra.mxu0 %v470
        %681 = vmatpush.msra.mxu0 %v466
        %682 = vmatpush.msra.mxu0 %v462
        %683 = vmatpush.msra.mxu0 %v458
        %684 = vmatpush.msra.mxu0 %v454
        %685 = vmatpush.msra.mxu0 %v450
        %686 = vmatpush.msra.mxu0 %v446
        %687 = vmatpush.msra.mxu0 %v442
        %688 = vmatpush.msra.mxu0 %v438
        %689 = vmatpush.msra.mxu0 %v434
        %690 = vmatpush.msra.mxu0 %v430
        %691 = vmatpush.msra.mxu0 %v426
        %692 = vmatpush.msra.mxu0 %v422
        %693 = vmatmul.f32.gmra.mxu0 %v417
        %v694 = vpop.f32.mrf.mxu0
        %v695 = vadd.f32 %v552, %v694
        %696 = vdwg.mxu0
        %697 = vmatpush.msra.mxu0 %v546
        %698 = vmatpush.msra.mxu0 %v542
        %699 = vmatpush.msra.mxu0 %v538
        %700 = vmatpush.msra.mxu0 %v534
        %701 = vmatpush.msra.mxu0 %v530
        %702 = vmatpush.msra.mxu0 %v526
        %703 = vmatpush.msra.mxu0 %v522
        %704 = vmatpush.msra.mxu0 %v518
        %705 = vmatpush.msra.mxu0 %v514
        %706 = vmatpush.msra.mxu0 %v510
        %707 = vmatpush.msra.mxu0 %v506
        %708 = vmatpush.msra.mxu0 %v502
        %709 = vmatpush.msra.mxu0 %v498
        %710 = vmatpush.msra.mxu0 %v494
        %711 = vmatpush.msra.mxu0 %v490
        %712 = vmatpush.msra.mxu0 %v486
        %713 = vmatmul.f32.gmra.mxu0 %v418
        %v714 = vpop.f32.mrf.mxu0
        %v715 = vadd.f32 %v695, %v714
        %716 = vdwg.mxu0
        %v717 = vxor.u32 %v595, 2147483648
        %v718 = vmul.f32 %v717, 1.442695
        %v719 = vpow.pop %v718
        %v720 = vadd.f32 %v719, 1.0
        %v721 = vrcp.pop %v720
        %v722 = vmul.f32 %v720, %v721
        %v723 = vsub.f32 1.0, %v722
        %v724 = vmul.f32 %v721, %v723
        %v725 = vadd.f32 %v721, %v724
        %vm726 = vweird.f32 %v720
        %vm727 = vweird.f32 %v721
        %vm728 = vmor %vm726, %vm727
        %v729 = vsel %vm728, %v721, %v725
        %v730 = vand.u32 2147483647, %v720
        %vm731 = vcmp.eq.f32.partialorder %v730, 8.507059e+37
        %v732 = vand.u32 %v720, 2147483648
        %v733 = vor.u32 1.1754944e-38, %v732
        %v734 = vsel %vm731, %v733, %v729
        %v735 = vmul.f32 1.0, %v734
        %v736 = vxor.u32 %v635, 2147483648
        %v737 = vmul.f32 %v736, 1.442695
        %v738 = vpow.pop %v737
        %v739 = vadd.f32 %v738, 1.0
        %v740 = vrcp.pop %v739
        %v741 = vmul.f32 %v739, %v740
        %v742 = vsub.f32 1.0, %v741
        %v743 = vmul.f32 %v740, %v742
        %v744 = vadd.f32 %v740, %v743
        %vm745 = vweird.f32 %v739
        %vm746 = vweird.f32 %v740
        %vm747 = vmor %vm745, %vm746
        %v748 = vsel %vm747, %v740, %v744
        %v749 = vand.u32 2147483647, %v739
        %vm750 = vcmp.eq.f32.partialorder %v749, 8.507059e+37
        %v751 = vand.u32 %v739, 2147483648
        %v752 = vor.u32 1.1754944e-38, %v751
        %v753 = vsel %vm750, %v752, %v748
        %v754 = vmul.f32 1.0, %v753
        %v755 = vtanh.pop %v675
        %v756 = vxor.u32 %v715, 2147483648
        %v757 = vmul.f32 %v756, 1.442695
        %v758 = vpow.pop %v757
        %v759 = vadd.f32 %v758, 1.0
        %v760 = vrcp.pop %v759
        %v761 = vmul.f32 %v759, %v760
        %v762 = vsub.f32 1.0, %v761
        %v763 = vmul.f32 %v760, %v762
        %v764 = vadd.f32 %v760, %v763
        %vm765 = vweird.f32 %v759
        %vm766 = vweird.f32 %v760
        %vm767 = vmor %vm765, %vm766
        %v768 = vsel %vm767, %v760, %v764
        %v769 = vand.u32 2147483647, %v759
        %vm770 = vcmp.eq.f32.partialorder %v769, 8.507059e+37
        %v771 = vand.u32 %v759, 2147483648
        %v772 = vor.u32 1.1754944e-38, %v771
        %v773 = vsel %vm770, %v772, %v768
        %v774 = vmul.f32 1.0, %v773
        %v775 = vld [vmem:[%s359] sm:$0xff]
        %v776 = vmul.f32 %v754, %v775
        %v777 = vmul.f32 %v735, %v755
        %v778 = vadd.f32 %v776, %v777
        %v779 = vtanh.pop %v778
        %v780 = vmul.f32 %v774, %v779
        %781 = vst [vmem:[%s401] sm:$0xff] %v780
        %782 = vst [vmem:[%s408] sm:$0xff] %v778
        %s783 = sadd.s32 %s31, 1
        %p784 = scmp.lt.s32.totalorder %s783, 3
        // Predicated region
        $region65: #{tpu_custom_call.1} parent=39 // pred_check
          %p785 = pneg %p784
        $region66: #{tpu_custom_call.1} parent=39 // pred_check_branch
          %787 = sbr.rel (%p785) target = $region68
        $region67: #{tpu_custom_call.1} parent=39 // pred_region
          %788 = vst [vmem:[#allocation2] sm:$0xff] %v780
        $region68: #{tpu_custom_call.1} parent=39 // pred_fallthru
          _
        %s789 = sand.u32 %s164, 1
        %s790 = scalar_lea.sflag [#allocation5], %s789
        %s791 = sand.u32 %s164, 1
        %s792 = smul.addr %s791, 8
        %s793 = scalar_lea.vmem [#allocation12], %s792
        %s794 = sand.u32 %s190, 1
        %s795 = scalar_lea.sflag [#allocation14], %s794
        %s796 = sand.u32 %s190, 1
        %s797 = smul.addr %s796, 8
        %s798 = scalar_lea.vmem [#allocation13], %s797
        // Predicated region
        $region69: #{tpu_custom_call.1} parent=39 // pred_check
          %p799 = pneg %p174
        $region70: #{tpu_custom_call.1} parent=39 // pred_check_branch
          %801 = sbr.rel (%p799) target = $region72
        $region71: #{tpu_custom_call.1} parent=39 // pred_region
          %803 = vsyncadd %s790, 0
          %s804 = smul.addr %s31, 8
          %s805 = scalar_lea.hbm %s5, %s804
          %s807 = sshll.u32 %s793, 4
          %s808 = int_to_ptr.vmem [resolvable:$true] %s807
          %s809 = sshll.u32 %s805, 4
          %s810 = int_to_ptr.hbm [resolvable:$true] %s809
          %812 = dma.vmem_to_hbm [thread:$0]  %s808, 128, %s810, %s790
        $region72: #{tpu_custom_call.1} parent=39 // pred_fallthru
          _
        // Predicated region
        $region73: #{tpu_custom_call.1} parent=39 // pred_check
          %p813 = pneg %p200
        $region74: #{tpu_custom_call.1} parent=39 // pred_check_branch
          %815 = sbr.rel (%p813) target = $region76
        $region75: #{tpu_custom_call.1} parent=39 // pred_region
          %817 = vsyncadd %s795, 0
          %s818 = smul.addr %s31, 8
          %s819 = scalar_lea.hbm %s6, %s818
          %s821 = sshll.u32 %s798, 4
          %s822 = int_to_ptr.vmem [resolvable:$true] %s821
          %s823 = sshll.u32 %s819, 4
          %s824 = int_to_ptr.hbm [resolvable:$true] %s823
          %826 = dma.vmem_to_hbm [thread:$0]  %s822, 128, %s824, %s795
        $region76: #{tpu_custom_call.1} parent=39 // pred_fallthru
          _
      $region40: #{tpu_custom_call.1} parent=5 // pred_fallthru
        _
      %p827 = scmp.le.s32.totalorder 2, %s26
      // Predicated region
      $region77: #{tpu_custom_call.1} parent=5 // pred_check
        %p828 = pneg %p827
      $region78: #{tpu_custom_call.1} parent=5 // pred_check_branch
        %830 = sbr.rel (%p828) target = $region80
      $region79: #{tpu_custom_call.1} parent=5 // pred_region
        %s831 = ssub.s32 %s26, 2
        // Predicated region
        $region81: #{tpu_custom_call.1} parent=79 // pred_check
          %p832 = pneg %p180
        $region82: #{tpu_custom_call.1} parent=79 // pred_check_branch
          %834 = sbr.rel (%p832) target = $region84
        $region83: #{tpu_custom_call.1} parent=79 // pred_region
          %s835 = sand.u32 %s165, 1
          %s836 = scalar_lea.sflag [#allocation5], %s835
          %s837 = sand.u32 %s165, 1
          %s838 = smul.addr %s837, 8
          %s839 = scalar_lea.vmem [#allocation12], %s838
          %841 = dma.done %s836, 128
        $region84: #{tpu_custom_call.1} parent=79 // pred_fallthru
          _
        // Predicated region
        $region85: #{tpu_custom_call.1} parent=79 // pred_check
          %p842 = pneg %p206
        $region86: #{tpu_custom_call.1} parent=79 // pred_check_branch
          %844 = sbr.rel (%p842) target = $region88
        $region87: #{tpu_custom_call.1} parent=79 // pred_region
          %s845 = sand.u32 %s191, 1
          %s846 = scalar_lea.sflag [#allocation14], %s845
          %s847 = sand.u32 %s191, 1
          %s848 = smul.addr %s847, 8
          %s849 = scalar_lea.vmem [#allocation13], %s848
          %851 = dma.done %s846, 128
        $region88: #{tpu_custom_call.1} parent=79 // pred_fallthru
          _
      $region80: #{tpu_custom_call.1} parent=5 // pred_fallthru
        _
    $region6: #{tpu_custom_call.1} parent=1 // loop_footer
      %s30 = sadd.s32 1, %s26
    $region7: #{tpu_custom_call.1} parent=1 // loop_footer_branch
      %25 = sbr.rel target = $region3
    $region8: #{tpu_custom_call.1} parent=1 // loop_exit
      _
    %852 = vsyncpa [#allocation4], 1
    %s853 = scalar_lea.sflag [#allocation4], 1
    %854 = vsyncpa %s853, 1
    %855 = vsyncpa [#allocation7], 1
    %s856 = scalar_lea.sflag [#allocation7], 1
    %857 = vsyncpa %s856, 1
    %858 = vsyncpa [#allocation10], 1
    %s859 = scalar_lea.sflag [#allocation10], 1
    %860 = vsyncpa %s859, 1
    %861 = vsyncpa [#allocation5], 1
    %s862 = scalar_lea.sflag [#allocation5], 1
    %863 = vsyncpa %s862, 1
    %864 = vsyncpa [#allocation14], 1
    %s865 = scalar_lea.sflag [#allocation14], 1
    %866 = vsyncpa %s865, 1

</llo_original>
